<compile_context>
chip_gen: v6e
topology: v6e:2x2x1
jax: 0.10.0
libtpu: 0.0.40
codegen_flags: <defaults>
</compile_context>

<pallas_src>
import functools

import jax
import jax.numpy as jnp
from jax.experimental import pallas as pl
from jax.experimental.pallas import tpu as pltpu

EPS = 1e-6  # F.pairwise_distance default eps


def _contrastive_loss_kernel(x1_ref, x2_ref, lbl_ref, out_ref, acc_ref,
                             *, margin, total_rows, block_rows):
    i = pl.program_id(0)
    n = pl.num_programs(0)

    @pl.when(i == 0)
    def _init():
        acc_ref[0] = jnp.float32(0.0)

    # Stream native dtype in; cast to f32 on the VPU (kernel is HBM-bound, VPU has slack).
    x1 = x1_ref[...].astype(jnp.float32)                      # (TB, D)
    x2 = x2_ref[...].astype(jnp.float32)                      # (TB, D)
    diff = x1 - x2 + EPS
    sq_dist = jnp.sum(diff * diff, axis=1, keepdims=True)     # (TB, 1)  lane reduce (XLU)
    dist = jnp.sqrt(sq_dist)                                  # (TB, 1)

    lbl = lbl_ref[...].astype(jnp.float32)                    # (TB, 1)
    per_row = (1.0 - lbl) * sq_dist \
        + lbl * jnp.square(jnp.maximum(margin - dist, 0.0))   # (TB, 1)

    # Mask rows past the real batch size (ragged last tile holds undefined padding).
    row = jax.lax.broadcasted_iota(jnp.int32, per_row.shape, 0)
    valid = (i * block_rows + row) < total_rows
    per_row = jnp.where(valid, per_row, 0.0)

    # Accumulate raw sum across grid steps; divide by B only once at the end.
    acc_ref[0] += jnp.sum(per_row)

    @pl.when(i == n - 1)
    def _finalize():
        out_ref[0, 0] = acc_ref[0] * jnp.float32(1.0 / total_rows)


def _sublane_multiple(dtype) -> int:
    """Minimum second-to-last-dim tiling multiple for this dtype."""
    itemsize = jnp.dtype(dtype).itemsize
    if itemsize >= 4:
        return 8
    if itemsize == 2:
        return 16
    return 32


def contrastive_loss(output1: jax.Array, output2: jax.Array, label: jax.Array,
                     *, margin: float = 3.0, max_block_rows: int = 2048) -> jax.Array:
    """output1, output2: (B, D); label: (B,). Returns scalar float32 loss."""
    B, D = output1.shape
    label2d = label.reshape(B, 1)

    # Row tile: biggest dtype-aligned tile that keeps 2 inputs x 2 buffers x TB x D under a
    # conservative budget (fits v5e's 16 MiB scoped default and v7x's smaller VMEM).
    vmem_budget = 8 * 1024 * 1024
    sub = _sublane_multiple(output1.dtype)
    bytes_per_row = max(D * output1.dtype.itemsize, 1)
    tb = max(sub, min(max_block_rows, vmem_budget // (4 * bytes_per_row)))
    tb = max(sub, (tb // sub) * sub)
    block_rows = B if B <= tb else tb          # full-extent block is always legal
    grid = (pl.cdiv(B, block_rows),)

    kernel = functools.partial(
        _contrastive_loss_kernel,
        margin=float(margin), total_rows=B, block_rows=block_rows)

    out = pl.pallas_call(
        kernel,
        out_shape=jax.ShapeDtypeStruct((1, 1), jnp.float32),
        grid_spec=pltpu.PrefetchScalarGridSpec(
            num_scalar_prefetch=0,
            grid=grid,
            in_specs=[
                pl.BlockSpec((block_rows, D), lambda i: (i, 0)),
                pl.BlockSpec((block_rows, D), lambda i: (i, 0)),
                pl.BlockSpec((block_rows, 1), lambda i: (i, 0)),
            ],
            out_specs=pl.BlockSpec(memory_space=pltpu.SMEM),
            scratch_shapes=[pltpu.SMEM((1,), jnp.float32)],
        ),
        compiler_params=pltpu.CompilerParams(
            dimension_semantics=("arbitrary",),
            vmem_limit_bytes=32 * 1024 * 1024),
    )(output1, output2, label2d)
    return out[0, 0]


def _reference(output1, output2, label, margin=3.0):
    # Pure-JAX reference mirroring F.pairwise_distance + contrastive loss.
    d = jnp.sqrt(jnp.sum(jnp.square(output1.astype(jnp.float32)
                                    - output2.astype(jnp.float32) + EPS), axis=1))
    pos = (1.0 - label) * d**2
    neg = label * jnp.square(jnp.maximum(margin - d, 0.0))
    return jnp.mean(pos + neg)


if __name__ == "__main__":
    key = jax.random.PRNGKey(0)

    # Test 1: small, single-tile path.
    k1, k2, k3 = jax.random.split(key, 3)
    B, D = 8, 128
    o1 = jax.random.normal(k1, (B, D), dtype=jnp.float32)
    o2 = jax.random.normal(k2, (B, D), dtype=jnp.float32)
    lbl = jax.random.bernoulli(k3, 0.5, (B,)).astype(jnp.float32)
    loss = jax.block_until_ready(contrastive_loss(o1, o2, lbl))
    ref = _reference(o1, o2, lbl)
    assert jnp.allclose(loss, ref, rtol=1e-5, atol=1e-5), (loss, ref)

    # Test 2: multi-tile grid with a ragged last tile (exercises masked accumulation).
    k4, k5, k6 = jax.random.split(jax.random.PRNGKey(1), 3)
    B2, D2 = 20, 256
    o1b = jax.random.normal(k4, (B2, D2), dtype=jnp.float32)
    o2b = jax.random.normal(k5, (B2, D2), dtype=jnp.float32)
    lblb = jax.random.bernoulli(k6, 0.5, (B2,)).astype(jnp.float32)
    loss2 = jax.block_until_ready(
        contrastive_loss(o1b, o2b, lblb, max_block_rows=8))
    ref2 = _reference(o1b, o2b, lblb)
    assert jnp.allclose(loss2, ref2, rtol=1e-5, atol=1e-5), (loss2, ref2)

    # Test 3: bf16 inputs stream in native dtype (half the HBM bytes), cast in-kernel.
    o1c = o1b.astype(jnp.bfloat16)
    o2c = o2b.astype(jnp.bfloat16)
    loss3 = jax.block_until_ready(contrastive_loss(o1c, o2c, lblb))
    ref3 = _reference(o1c, o2c, lblb)
    assert jnp.allclose(loss3, ref3, rtol=2e-2, atol=2e-2), (loss3, ref3)

    print("KERNEL_OK")
</pallas_src>

<mosaic_0001>
module attributes {stable_mosaic.version = 11 : i64} {
  func.func @_contrastive_loss_kernel(%arg0: i32, %arg1: memref<8x128xf32, #tpu.memory_space<vmem>>, %arg2: memref<8x128xf32, #tpu.memory_space<vmem>>, %arg3: memref<8x1xf32, #tpu.memory_space<vmem>>, %arg4: memref<1x1xf32, #tpu.memory_space<smem>>, %arg5: memref<1xf32, #tpu.memory_space<smem>>) attributes {dimension_semantics = [#tpu.dimension_semantics<arbitrary>], iteration_bounds = array<i64: 1>, scalar_prefetch = 0 : i64, scratch_operands = 1 : i64, tpu.core_type = #tpu.core_type<tc>, window_params = [{transform_indices = @transform_0, window_bounds = array<i64: 8, 128>}, {transform_indices = @transform_1, window_bounds = array<i64: 8, 128>}, {transform_indices = @transform_2, window_bounds = array<i64: 8, 1>}, {transform_indices = @transform_3, window_bounds = array<i64: 1, 1>}]} {
    %c0_i32 = arith.constant 0 : i32
    %0 = arith.cmpi eq, %arg0, %c0_i32 : i32
    %1 = arith.extui %0 : i1 to i32
    %c0_i32_0 = arith.constant 0 : i32
    %2 = arith.cmpi ne, %1, %c0_i32_0 : i32
    scf.if %2 {
      %cst_17 = arith.constant 0.000000e+00 : f32
      %c0_18 = arith.constant 0 : index
      %41 = memref.load %arg5[%c0_18] : memref<1xf32, #tpu.memory_space<smem>>
      memref.store %cst_17, %arg5[%c0_18] : memref<1xf32, #tpu.memory_space<smem>>
    } else {
    }
    %c0 = arith.constant 0 : index
    %c0_1 = arith.constant 0 : index
    %3 = vector.load %arg1[%c0, %c0_1] : memref<8x128xf32, #tpu.memory_space<vmem>>, vector<8x128xf32>
    %c0_2 = arith.constant 0 : index
    %c0_3 = arith.constant 0 : index
    %4 = vector.load %arg2[%c0_2, %c0_3] : memref<8x128xf32, #tpu.memory_space<vmem>>, vector<8x128xf32>
    %5 = arith.subf %3, %4 : vector<8x128xf32>
    %cst = arith.constant 9.99999997E-7 : f32
    %6 = vector.broadcast %cst : f32 to vector<8x128xf32>
    %7 = arith.addf %5, %6 : vector<8x128xf32>
    %8 = arith.mulf %7, %7 : vector<8x128xf32>
    %cst_4 = arith.constant dense<0.000000e+00> : vector<8xf32>
    %9 = vector.multi_reduction <add>, %8, %cst_4 [1] : vector<8x128xf32> to vector<8xf32>
    %10 = vector.shape_cast %9 : vector<8xf32> to vector<8x1xf32>
    %11 = math.sqrt %10 : vector<8x1xf32>
    %c0_5 = arith.constant 0 : index
    %c0_6 = arith.constant 0 : index
    %12 = vector.load %arg3[%c0_5, %c0_6] : memref<8x1xf32, #tpu.memory_space<vmem>>, vector<8x1xf32>
    %cst_7 = arith.constant 1.000000e+00 : f32
    %13 = vector.broadcast %cst_7 : f32 to vector<8x1xf32>
    %14 = arith.subf %13, %12 : vector<8x1xf32>
    %15 = arith.mulf %14, %10 : vector<8x1xf32>
    %cst_8 = arith.constant 3.000000e+00 : f32
    %16 = vector.broadcast %cst_8 : f32 to vector<8x1xf32>
    %17 = arith.subf %16, %11 : vector<8x1xf32>
    %cst_9 = arith.constant 0.000000e+00 : f32
    %18 = vector.broadcast %cst_9 : f32 to vector<8x1xf32>
    %19 = arith.maximumf %17, %18 : vector<8x1xf32>
    %20 = arith.mulf %19, %19 : vector<8x1xf32>
    %21 = arith.mulf %12, %20 : vector<8x1xf32>
    %22 = arith.addf %15, %21 : vector<8x1xf32>
    %23 = tpu.iota {dimensions = array<i32: 0>} : vector<8x1xi32>
    %c8_i32 = arith.constant 8 : i32
    %24 = arith.muli %arg0, %c8_i32 : i32
    %25 = vector.broadcast %24 : i32 to vector<8x1xi32>
    %26 = arith.addi %25, %23 : vector<8x1xi32>
    %c8_i32_10 = arith.constant 8 : i32
    %27 = vector.broadcast %c8_i32_10 : i32 to vector<8x1xi32>
    %28 = arith.cmpi slt, %26, %27 : vector<8x1xi32>
    %cst_11 = arith.constant 0.000000e+00 : f32
    %29 = vector.broadcast %cst_11 : f32 to vector<8x1xf32>
    %30 = arith.select %28, %22, %29 : vector<8x1xi1>, vector<8x1xf32>
    %c0_12 = arith.constant 0 : index
    %31 = memref.load %arg5[%c0_12] : memref<1xf32, #tpu.memory_space<smem>>
    %32 = vector.shape_cast %30 : vector<8x1xf32> to vector<1x8x1xf32>
    %cst_13 = arith.constant dense<0.000000e+00> : vector<1xf32>
    %33 = vector.multi_reduction <add>, %32, %cst_13 [1, 2] : vector<1x8x1xf32> to vector<1xf32>
    %34 = vector.shape_cast %33 : vector<1xf32> to vector<1x1x1xf32>
    %35 = vector.extract %34[0, 0, 0] : f32 from vector<1x1x1xf32>
    %36 = arith.addf %31, %35 : f32
    %c0_14 = arith.constant 0 : index
    %37 = memref.load %arg5[%c0_14] : memref<1xf32, #tpu.memory_space<smem>>
    memref.store %36, %arg5[%c0_14] : memref<1xf32, #tpu.memory_space<smem>>
    %c0_i32_15 = arith.constant 0 : i32
    %38 = arith.cmpi eq, %arg0, %c0_i32_15 : i32
    %39 = arith.extui %38 : i1 to i32
    %c0_i32_16 = arith.constant 0 : i32
    %40 = arith.cmpi ne, %39, %c0_i32_16 : i32
    scf.if %40 {
      %c0_17 = arith.constant 0 : index
      %41 = memref.load %arg5[%c0_17] : memref<1xf32, #tpu.memory_space<smem>>
      %cst_18 = arith.constant 1.250000e-01 : f32
      %42 = arith.mulf %41, %cst_18 : f32
      %c0_19 = arith.constant 0 : index
      %c0_20 = arith.constant 0 : index
      %43 = memref.load %arg4[%c0_19, %c0_20] : memref<1x1xf32, #tpu.memory_space<smem>>
      memref.store %42, %arg4[%c0_19, %c0_20] : memref<1x1xf32, #tpu.memory_space<smem>>
    } else {
    }
    return
  }
  func.func @transform_0(%arg0: i32) -> (i32, i32) {
    %c0_i32 = arith.constant 0 : i32
    %c0_i32_0 = arith.constant 0 : i32
    return %arg0, %c0_i32 : i32, i32
  }
  func.func @transform_1(%arg0: i32) -> (i32, i32) {
    %c0_i32 = arith.constant 0 : i32
    %c0_i32_0 = arith.constant 0 : i32
    return %arg0, %c0_i32 : i32, i32
  }
  func.func @transform_2(%arg0: i32) -> (i32, i32) {
    %c0_i32 = arith.constant 0 : i32
    %c0_i32_0 = arith.constant 0 : i32
    return %arg0, %c0_i32 : i32, i32
  }
  func.func @transform_3(%arg0: i32) -> (i32, i32) {
    %c0_i32 = arith.constant 0 : i32
    %c0_i32_0 = arith.constant 0 : i32
    %c0_i32_1 = arith.constant 0 : i32
    return %c0_i32, %c0_i32_0 : i32, i32
  }
}

</mosaic_0001>

<llo_original>
// kernel: tpu_custom_call.1
$region0: #{tpu_custom_call.1}
  #allocation0 [shape = 'u32[]', space=smem, size = 0x4, offset = 0x4, fixed_abs, tag = 'smem constant byte address 0x4 - core index']
  #allocation1 [shape = 'u32[144,128]{1,0:T(1,128)}', space=vmem, size = 0x12000, scoped, tag = 'internal scratch']
  #allocation2 [shape = 'f32[1]{0:T(128)}', space=smem, size = 0x200, scoped, tag = 'scratch operand']
  %s0 = inlined_call_operand.vmem [shape: f32[8,128], index: 0, kind: input, shape index: {}]
  %s1 = inlined_call_operand.hbm [shape: f32[8,128], index: 1, kind: input, shape index: {}]
  %s2 = inlined_call_operand.vmem [shape: f32[8,1], index: 2, kind: input, shape index: {}]
  %s3 = inlined_call_operand.hbm [shape: f32[1,1], index: 3, kind: output, shape index: {}]
  %s4 = sld [smem:[#allocation0]]
  $region34: #{tpu_custom_call.1} parent=0
    _
  %s6 = ssub.s32 1, %s4
  %s7 = scalar_select 0, %s6, %s4
  $region1: #{tpu_custom_call.1} parent=0
    #allocation3 [shape = 'u8[4096]{0}', space=vmem, size = 0x1000, scoped, tag = 'input window, operand 1, single buffered']
    #allocation4 [shape = 's32[1]{0}', space=sflag, size = 0x4, scoped, tag = 'scoped memory for tpu_custom_call.1']
    #allocation5 [shape = 's32[1]{0}', space=sflag, size = 0x4, scoped, tag = 'scoped memory for tpu_custom_call.1']
    #allocation6 [shape = 'u8[512]{0}', space=smem, size = 0x200, scoped, tag = 'output window, operand 0, single buffered']
    %8 = vsyncpa [#allocation4], 0
    %9 = vsyncpa [#allocation5], 0
    // Predicated region
    $region2: #{tpu_custom_call.1} parent=1 // pred_check
      _
    $region3: #{tpu_custom_call.1} parent=1 // pred_check_branch
      %11 = sbr.rel (0) target = $region5
    $region4: #{tpu_custom_call.1} parent=1 // pred_region
      _
    $region5: #{tpu_custom_call.1} parent=1 // pred_fallthru
      _
    // Predicated region
    $region6: #{tpu_custom_call.1} parent=1 // pred_check
      _
    $region7: #{tpu_custom_call.1} parent=1 // pred_check_branch
      %13 = sbr.rel (0) target = $region9
    $region8: #{tpu_custom_call.1} parent=1 // pred_region
      %s15 = ssub.s32 128, 128
      %16 = vsyncadd [#allocation4], %s15
      %s18 = sshll.u32 [#allocation3], 4
      %s19 = int_to_ptr.vmem [resolvable:$true] %s18
      %21 = dma.hbm_to_vmem [thread:$0]  %s1, 128, %s19, [#allocation4]
    $region9: #{tpu_custom_call.1} parent=1 // pred_fallthru
      _
    // Predicated region
    $region10: #{tpu_custom_call.1} parent=1 // pred_check
      _
    $region11: #{tpu_custom_call.1} parent=1 // pred_check_branch
      %23 = sbr.rel (0) target = $region13
    $region12: #{tpu_custom_call.1} parent=1 // pred_region
      _
    $region13: #{tpu_custom_call.1} parent=1 // pred_fallthru
      _
    // Predicated region
    $region14: #{tpu_custom_call.1} parent=1 // pred_check
      _
    $region15: #{tpu_custom_call.1} parent=1 // pred_check_branch
      %25 = sbr.rel (0) target = $region17
    $region16: #{tpu_custom_call.1} parent=1 // pred_region
      %26 = dma.done [#allocation4], 128
    $region17: #{tpu_custom_call.1} parent=1 // pred_fallthru
      _
    %p27 = scmp.eq.s32.totalorder 0, 0
    // Predicated region
    $region18: #{tpu_custom_call.1} parent=1 // pred_check
      %p28 = pneg %p27
    $region19: #{tpu_custom_call.1} parent=1 // pred_check_branch
      %30 = sbr.rel (%p28) target = $region21
    $region20: #{tpu_custom_call.1} parent=1 // pred_region
      %s31 = scalar_lea.smem [#allocation2], 0
      %32 = sst [smem:[%s31]] 0.0
    $region21: #{tpu_custom_call.1} parent=1 // pred_fallthru
      _
    %v33 = vld [vmem:[%s0] sm:$0xff]
    %v34 = vld [vmem:[#allocation3] sm:$0xff]
    %v35 = vsub.f32 %v33, %v34
    %v36 = vadd.f32 %v35, 1e-06
    %v37 = vmul.f32 %v36, %v36
    %38 = vadd.xlane.f32.xlu0 %v37
    %v39 = vpop.xlane.xlu0 %38
    %v40 = vrsqrt.pop %v39
    %v41 = vmul.f32 %v39, %v40
    %vm42 = vcmp.eq.f32.partialorder %v39, inf
    %v43 = vsel %vm42, %v39, %v41
    %vm44 = vcmp.eq.f32.partialorder %v39, 0.0
    %v45 = vand.u32 %v39, 2147483648
    %v46 = vsel %vm44, %v45, %v43
    %v47 = vld [vmem:[%s2] sm:$0xff]
    %v48 = vsub.f32 1.0, %v47
    %v49 = vmul.f32 %v48, %v39
    %v50 = vsub.f32 3.0, %v46
    %v51 = vmax.f32 %v50, 0.0
    %v52 = vmul.f32 %v51, %v51
    %v53 = vmul.f32 %v47, %v52
    %v54 = vadd.f32 %v49, %v53
    %v55 = vlaneseq
    %v56 = vshrl.u32 %v55, 7
    %s57 = smul.u32 0, 8
    %v58 = vstv %s57
    %v59 = vadd.s32 %v58, %v56
    %vm60 = vcmp.lt.s32.totalorder %v59, 8
    %v61 = vsel %vm60, %v54, 0.0
    %s62 = sld [smem:[#allocation2]]
    %vm63 = vcmask 7168
    %v64 = vsel %vm63, %v61, 0.0
    %65 = vadd.xlane.f32.xlu0 %v64
    %v66 = vpop.xlane.xlu0 %65
    %v67 = vrot.slane %v66, 4
    %v68 = vadd.f32 %v66, %v67
    %v69 = vrot.slane %v68, 2
    %v70 = vadd.f32 %v68, %v69
    %v71 = vrot.slane %v70, 1
    %v72 = vadd.f32 %v70, %v71
    %s73 = vtos %v72
    %s74 = sadd.f32 %s62, %s73
    %s75 = scalar_lea.smem [#allocation2], 0
    %76 = sst [smem:[%s75]] %s74
    // Predicated region
    $region22: #{tpu_custom_call.1} parent=1 // pred_check
      %p77 = pneg %p27
    $region23: #{tpu_custom_call.1} parent=1 // pred_check_branch
      %79 = sbr.rel (%p77) target = $region25
    $region24: #{tpu_custom_call.1} parent=1 // pred_region
      %s80 = sld [smem:[#allocation2]]
      %s81 = smul.f32 %s80, 0.125
      %s82 = scalar_lea.smem [#allocation6], 0
      %83 = sst [smem:[%s82]] %s81
    $region25: #{tpu_custom_call.1} parent=1 // pred_fallthru
      _
    // Predicated region
    $region26: #{tpu_custom_call.1} parent=1 // pred_check
      _
    $region27: #{tpu_custom_call.1} parent=1 // pred_check_branch
      %85 = sbr.rel (0) target = $region29
    $region28: #{tpu_custom_call.1} parent=1 // pred_region
      %s87 = ssub.s32 16, 16
      %88 = vsyncadd [#allocation5], %s87
      %91 = dma.smem_to_hbm [#allocation6], 16, %s3, [#allocation5]
    $region29: #{tpu_custom_call.1} parent=1 // pred_fallthru
      _
    // Predicated region
    $region30: #{tpu_custom_call.1} parent=1 // pred_check
      _
    $region31: #{tpu_custom_call.1} parent=1 // pred_check_branch
      %93 = sbr.rel (0) target = $region33
    $region32: #{tpu_custom_call.1} parent=1 // pred_region
      %94 = dma.done [#allocation5], 16
    $region33: #{tpu_custom_call.1} parent=1 // pred_fallthru
      _
    %95 = sfence
    %96 = vsyncpa [#allocation4], 1
    %97 = vsyncpa [#allocation5], 1

</llo_original>
